<compile_context>
chip_gen: v6e
topology: v6e:2x2x1
jax: 0.10.0
libtpu: 0.0.40
codegen_flags: <defaults>
</compile_context>

<pallas_src>
import math

import jax
import jax.numpy as jnp
from jax.experimental import pallas as pl
from jax.experimental.pallas import tpu as pltpu

LANE = 128


def _round_up(a, b):
    return (a + b - 1) // b * b


def _make_mlp_kernel(f_in, f_h, f_out):
    """Two tiny linears + ReLU, with the flattened batch*seq dim along lanes."""

    def kernel(w1_ref, b1_ref, w2_ref, x_ref, b2_ref, o_ref):
        # w1_ref: SMEM (f_h, f_in)   first-layer weights (scalars)
        # b1_ref: SMEM (f_h,)        first-layer bias
        # w2_ref: SMEM (f_out, f_h)  second-layer weights (scalars)
        # x_ref : VMEM (f_in, TL)    streamed column tile of the flattened input
        # b2_ref: VMEM (f_out, TL)   resident per-position second-layer bias (W2 broadcast)
        # o_ref : VMEM (f_out, TL)   lane-dense output tile
        x = x_ref[...]

        # Layer 1: h_j = relu(sum_i W1[j,i] * x[i,:] + b1[j])  — VPU scalar-broadcast FMAs.
        h = []
        for j in range(f_h):
            acc = x[0:1, :] * w1_ref[j, 0]
            for i in range(1, f_in):
                acc = acc + x[i:i + 1, :] * w1_ref[j, i]
            h.append(jnp.maximum(acc + b1_ref[j], 0.0))

        # Layer 2: out_f = sum_j W2[f,j] * h_j + bias2[f,:]
        for f in range(f_out):
            acc = h[0] * w2_ref[f, 0]
            for j in range(1, f_h):
                acc = acc + h[j] * w2_ref[f, j]
            o_ref[f:f + 1, :] = acc + b2_ref[f:f + 1, :]

    return kernel


@jax.jit
def model_forward(x1, w1, b1, w2):
    """x1: (B, S, F_in); w1: (F_h, F_in); b1: (F_h,); w2: (F_out, F_h).
    Returns v5 = (relu(x1 @ W1^T + b1) @ W2^T + W2).unsqueeze(-1): (B, S, F_out, 1)."""
    B, S, F_in = x1.shape
    F_h = w1.shape[0]
    F_out = w2.shape[0]
    N = B * S

    # PyTorch F.linear(v3, W2, W2): the (F_out, F_h) "bias" matrix broadcasts against the
    # (B, S, F_out) activations, i.e. bias[s, f] = W2[s, f]. Only valid when W2 broadcasts
    # to (S, F_out) (true for this module: every dim is 2).
    assert w2.shape == (S, F_out) or w2.shape == (1, F_out), (
        "second-layer bias (=W2) must broadcast over (S, F_out); shapes diverge from PyTorch")
    bias2 = jnp.broadcast_to(w2.astype(jnp.float32), (S, F_out))

    # Tile the flattened batch*seq dim along lanes. Tiles must be lane-aligned AND a
    # multiple of S so the resident per-position bias tile has the right phase everywhere.
    unit = (LANE * S) // math.gcd(LANE, S)
    max_tl = 128 * 1024                      # cap columns/tile (~1 MiB per f32 input buffer)
    np1 = _round_up(N, unit)
    if np1 <= max_tl:
        steps = 1                            # single grid step for small/medium N
        TL = np1
    else:
        steps = 2 * pl.cdiv(np1, 2 * max_tl)  # even step count -> balances v7x's 2 TCs
        TL = _round_up(pl.cdiv(np1, steps), unit)
    NP = TL * steps
    assert TL % S == 0 and NP % TL == 0 and TL % LANE == 0

    # Layout plumbing (fused under jit): columns-along-lanes input, per-column bias tile.
    x_cols = jnp.pad(x1.reshape(N, F_in).T.astype(jnp.float32), ((0, 0), (0, NP - N)))
    b2_cols = jnp.tile(bias2.T, (1, TL // S))            # column n gets bias2[n % S, :]
    w1f = w1.astype(jnp.float32)
    b1f = b1.astype(jnp.float32)
    w2f = w2.astype(jnp.float32)

    flops = 2 * N * (F_in * F_h + F_h * F_out) + N * F_h
    bytes_accessed = 4 * (N * F_in + N * F_out + F_out * TL
                          + F_h * F_in + F_h + F_out * F_h)

    out_cols = pl.pallas_call(
        _make_mlp_kernel(F_in, F_h, F_out),
        out_shape=jax.ShapeDtypeStruct((F_out, NP), jnp.float32),
        grid=(steps,),
        in_specs=[
            pl.BlockSpec(memory_space=pltpu.MemorySpace.SMEM),   # W1 (scalar weights)
            pl.BlockSpec(memory_space=pltpu.MemorySpace.SMEM),   # b1
            pl.BlockSpec(memory_space=pltpu.MemorySpace.SMEM),   # W2 (scalar weights)
            pl.BlockSpec((F_in, TL), lambda i: (0, i)),          # x columns (streamed)
            pl.BlockSpec((F_out, TL), lambda i: (0, 0)),         # bias tile (resident)
        ],
        out_specs=pl.BlockSpec((F_out, TL), lambda i: (0, i)),   # lane-dense output
        compiler_params=pltpu.CompilerParams(
            dimension_semantics=("parallel",),     # shardable across v7x's 2 TensorCores
            vmem_limit_bytes=32 * 1024 * 1024,     # safe under v7x's 64 MiB/TC VMEM
        ),
        cost_estimate=pl.CostEstimate(flops=flops, bytes_accessed=bytes_accessed,
                                      transcendentals=0),
    )(w1f, b1f, w2f, x_cols, b2_cols)

    v4 = out_cols[:, :N].T.reshape(B, S, F_out)
    return v4[..., None]       # unsqueeze(dim=-1) stays in the (jitted) wrapper


if __name__ == "__main__":
    key = jax.random.PRNGKey(0)
    k_x, k_w1, k_b1, k_w2 = jax.random.split(key, 4)

    # Shapes fixed by the module: x1 = torch.randn(1, 2, 2), two Linear(2, 2) layers.
    B, S, F = 1, 2, 2
    x1 = jax.random.normal(k_x, (B, S, F), dtype=jnp.float32)
    bound = 1.0 / math.sqrt(F)
    w1 = jax.random.uniform(k_w1, (F, F), jnp.float32, -bound, bound)
    b1 = jax.random.uniform(k_b1, (F,), jnp.float32, -bound, bound)
    w2 = jax.random.uniform(k_w2, (F, F), jnp.float32, -bound, bound)

    def ref_forward(x):
        ref_h = jnp.maximum(x @ w1.T + b1, 0.0)
        return (ref_h @ w2.T + w2)[..., None]   # bias == W2, broadcast over batch

    v5 = jax.block_until_ready(model_forward(x1, w1, b1, w2))
    assert v5.shape == (B, S, F, 1), v5.shape
    assert jnp.allclose(v5, ref_forward(x1), atol=1e-5, rtol=1e-5)

    # Extra check with B > 1 (exercises the bias broadcast over batch, lane padding, and
    # the columns-along-lanes layout with a larger flattened N).
    xb = jax.random.normal(jax.random.PRNGKey(1), (300, S, F), dtype=jnp.float32)
    vb = jax.block_until_ready(model_forward(xb, w1, b1, w2))
    assert vb.shape == (300, S, F, 1), vb.shape
    assert jnp.allclose(vb, ref_forward(xb), atol=1e-5, rtol=1e-5)

    print("KERNEL_OK")
</pallas_src>

<mosaic_0001>
module attributes {stable_mosaic.version = 11 : i64} {
  func.func @kernel(%arg0: i32, %arg1: memref<2x2xf32, #tpu.memory_space<smem>>, %arg2: memref<2xf32, #tpu.memory_space<smem>>, %arg3: memref<2x2xf32, #tpu.memory_space<smem>>, %arg4: memref<2x128xf32, #tpu.memory_space<vmem>>, %arg5: memref<2x128xf32, #tpu.memory_space<vmem>>, %arg6: memref<2x128xf32, #tpu.memory_space<vmem>>) attributes {dimension_semantics = [#tpu.dimension_semantics<parallel>], iteration_bounds = array<i64: 1>, scalar_prefetch = 0 : i64, scratch_operands = 0 : i64, tpu.core_type = #tpu.core_type<tc>, window_params = [{transform_indices = @transform_0, window_bounds = array<i64: 2, 2>}, {transform_indices = @transform_1, window_bounds = array<i64: 2>}, {transform_indices = @transform_2, window_bounds = array<i64: 2, 2>}, {transform_indices = @transform_3, window_bounds = array<i64: 2, 128>}, {pipeline_mode = #tpu.pipeline_mode<synchronous>, transform_indices = @transform_4, window_bounds = array<i64: 2, 128>}, {transform_indices = @transform_5, window_bounds = array<i64: 2, 128>}]} {
    %c0 = arith.constant 0 : index
    %c0_0 = arith.constant 0 : index
    %0 = vector.load %arg4[%c0, %c0_0] : memref<2x128xf32, #tpu.memory_space<vmem>>, vector<2x128xf32>
    %1 = vector.extract_strided_slice %0 {offsets = [0, 0], sizes = [1, 128], strides = [1, 1]} : vector<2x128xf32> to vector<1x128xf32>
    %c0_1 = arith.constant 0 : index
    %c0_2 = arith.constant 0 : index
    %2 = memref.load %arg1[%c0_1, %c0_2] : memref<2x2xf32, #tpu.memory_space<smem>>
    %3 = vector.broadcast %2 : f32 to vector<1x128xf32>
    %4 = arith.mulf %1, %3 : vector<1x128xf32>
    %5 = vector.extract_strided_slice %0 {offsets = [1, 0], sizes = [1, 128], strides = [1, 1]} : vector<2x128xf32> to vector<1x128xf32>
    %c0_3 = arith.constant 0 : index
    %c1 = arith.constant 1 : index
    %6 = memref.load %arg1[%c0_3, %c1] : memref<2x2xf32, #tpu.memory_space<smem>>
    %7 = vector.broadcast %6 : f32 to vector<1x128xf32>
    %8 = arith.mulf %5, %7 : vector<1x128xf32>
    %9 = arith.addf %4, %8 : vector<1x128xf32>
    %c0_4 = arith.constant 0 : index
    %10 = memref.load %arg2[%c0_4] : memref<2xf32, #tpu.memory_space<smem>>
    %11 = vector.broadcast %10 : f32 to vector<1x128xf32>
    %12 = arith.addf %9, %11 : vector<1x128xf32>
    %cst = arith.constant 0.000000e+00 : f32
    %13 = vector.broadcast %cst : f32 to vector<1x128xf32>
    %14 = arith.maximumf %12, %13 : vector<1x128xf32>
    %15 = vector.extract_strided_slice %0 {offsets = [0, 0], sizes = [1, 128], strides = [1, 1]} : vector<2x128xf32> to vector<1x128xf32>
    %c1_5 = arith.constant 1 : index
    %c0_6 = arith.constant 0 : index
    %16 = memref.load %arg1[%c1_5, %c0_6] : memref<2x2xf32, #tpu.memory_space<smem>>
    %17 = vector.broadcast %16 : f32 to vector<1x128xf32>
    %18 = arith.mulf %15, %17 : vector<1x128xf32>
    %19 = vector.extract_strided_slice %0 {offsets = [1, 0], sizes = [1, 128], strides = [1, 1]} : vector<2x128xf32> to vector<1x128xf32>
    %c1_7 = arith.constant 1 : index
    %c1_8 = arith.constant 1 : index
    %20 = memref.load %arg1[%c1_7, %c1_8] : memref<2x2xf32, #tpu.memory_space<smem>>
    %21 = vector.broadcast %20 : f32 to vector<1x128xf32>
    %22 = arith.mulf %19, %21 : vector<1x128xf32>
    %23 = arith.addf %18, %22 : vector<1x128xf32>
    %c1_9 = arith.constant 1 : index
    %24 = memref.load %arg2[%c1_9] : memref<2xf32, #tpu.memory_space<smem>>
    %25 = vector.broadcast %24 : f32 to vector<1x128xf32>
    %26 = arith.addf %23, %25 : vector<1x128xf32>
    %cst_10 = arith.constant 0.000000e+00 : f32
    %27 = vector.broadcast %cst_10 : f32 to vector<1x128xf32>
    %28 = arith.maximumf %26, %27 : vector<1x128xf32>
    %c0_11 = arith.constant 0 : index
    %c0_12 = arith.constant 0 : index
    %29 = memref.load %arg3[%c0_11, %c0_12] : memref<2x2xf32, #tpu.memory_space<smem>>
    %30 = vector.broadcast %29 : f32 to vector<1x128xf32>
    %31 = arith.mulf %14, %30 : vector<1x128xf32>
    %c0_13 = arith.constant 0 : index
    %c1_14 = arith.constant 1 : index
    %32 = memref.load %arg3[%c0_13, %c1_14] : memref<2x2xf32, #tpu.memory_space<smem>>
    %33 = vector.broadcast %32 : f32 to vector<1x128xf32>
    %34 = arith.mulf %28, %33 : vector<1x128xf32>
    %35 = arith.addf %31, %34 : vector<1x128xf32>
    %c0_15 = arith.constant 0 : index
    %c0_16 = arith.constant 0 : index
    %36 = vector.load %arg5[%c0_15, %c0_16] : memref<2x128xf32, #tpu.memory_space<vmem>>, vector<1x128xf32>
    %37 = arith.addf %35, %36 : vector<1x128xf32>
    %c0_17 = arith.constant 0 : index
    %c0_18 = arith.constant 0 : index
    %38 = vector.load %arg6[%c0_17, %c0_18] : memref<2x128xf32, #tpu.memory_space<vmem>>, vector<1x128xf32>
    tpu.vector_store %arg6[%c0_17, %c0_18], %37 {strides = array<i32>} : memref<2x128xf32, #tpu.memory_space<vmem>>, vector<1x128xf32>,
    %c1_19 = arith.constant 1 : index
    %c0_20 = arith.constant 0 : index
    %39 = memref.load %arg3[%c1_19, %c0_20] : memref<2x2xf32, #tpu.memory_space<smem>>
    %40 = vector.broadcast %39 : f32 to vector<1x128xf32>
    %41 = arith.mulf %14, %40 : vector<1x128xf32>
    %c1_21 = arith.constant 1 : index
    %c1_22 = arith.constant 1 : index
    %42 = memref.load %arg3[%c1_21, %c1_22] : memref<2x2xf32, #tpu.memory_space<smem>>
    %43 = vector.broadcast %42 : f32 to vector<1x128xf32>
    %44 = arith.mulf %28, %43 : vector<1x128xf32>
    %45 = arith.addf %41, %44 : vector<1x128xf32>
    %c1_23 = arith.constant 1 : index
    %c0_24 = arith.constant 0 : index
    %46 = vector.load %arg5[%c1_23, %c0_24] : memref<2x128xf32, #tpu.memory_space<vmem>>, vector<1x128xf32>
    %47 = arith.addf %45, %46 : vector<1x128xf32>
    %c1_25 = arith.constant 1 : index
    %c0_26 = arith.constant 0 : index
    %48 = vector.load %arg6[%c1_25, %c0_26] : memref<2x128xf32, #tpu.memory_space<vmem>>, vector<1x128xf32>
    tpu.vector_store %arg6[%c1_25, %c0_26], %47 {strides = array<i32>} : memref<2x128xf32, #tpu.memory_space<vmem>>, vector<1x128xf32>,
    return
  }
  func.func @transform_0(%arg0: i32) -> (i32, i32) {
    %c0_i32 = arith.constant 0 : i32
    %c0_i32_0 = arith.constant 0 : i32
    %c0_i32_1 = arith.constant 0 : i32
    return %c0_i32, %c0_i32_0 : i32, i32
  }
  func.func @transform_1(%arg0: i32) -> i32 {
    %c0_i32 = arith.constant 0 : i32
    %c0_i32_0 = arith.constant 0 : i32
    return %c0_i32 : i32
  }
  func.func @transform_2(%arg0: i32) -> (i32, i32) {
    %c0_i32 = arith.constant 0 : i32
    %c0_i32_0 = arith.constant 0 : i32
    %c0_i32_1 = arith.constant 0 : i32
    return %c0_i32, %c0_i32_0 : i32, i32
  }
  func.func @transform_3(%arg0: i32) -> (i32, i32) {
    %c0_i32 = arith.constant 0 : i32
    %c0_i32_0 = arith.constant 0 : i32
    return %c0_i32, %arg0 : i32, i32
  }
  func.func @transform_4(%arg0: i32) -> (i32, i32) {
    %c0_i32 = arith.constant 0 : i32
    %c0_i32_0 = arith.constant 0 : i32
    %c0_i32_1 = arith.constant 0 : i32
    return %c0_i32, %c0_i32_0 : i32, i32
  }
  func.func @transform_5(%arg0: i32) -> (i32, i32) {
    %c0_i32 = arith.constant 0 : i32
    %c0_i32_0 = arith.constant 0 : i32
    return %c0_i32, %arg0 : i32, i32
  }
}

</mosaic_0001>

<llo_original>
// kernel: tile.9
$region0: #{tile.9}
  %s0 = inlined_call_operand.vmem [shape: f32[2,64,2], index: 0, kind: input, shape index: {}]
  %s1 = inlined_call_operand.vmem [shape: f32[2,128], index: 1, kind: output, shape index: {}]
  $region1: #{tile.9} parent=0
    #allocation0 [shape = 'u8[4096]{0}', space=vmem, size = 0x1000, scoped, tag = 'scoped mem for output reshape']
    %v2 = vld [vmem:[%s0] sm:$0x1]
    %s3 = scalar_lea.vmem %s0, 63
    %v4 = vld [vmem:[%s3] sm:$0x2]
    %vm5 = vcmask 1041409
    %v6 = vsel %vm5, %v4, %v2
    %vm7 = vcmask 15360
    %8 = vst.msk [vmem:[#allocation0] sm:$0x3] %vm7, %v6
    %s9 = scalar_lea.vmem %s0, 63
    %v10 = vld [vmem:[%s9] sm:$0x1]
    %s11 = scalar_lea.vmem %s0, 126
    %v12 = vld [vmem:[%s11] sm:$0x2]
    %vm13 = vcmask 1041409
    %v14 = vsel %vm13, %v12, %v10
    %15 = vrot.lane.b32.xlu0 %v14, 126
    %v16 = vpop.permute.xlu0 %15
    %vm17 = vcmask 1048560
    %18 = vst.msk [vmem:[#allocation0] sm:$0x3] %vm17, %v16
    %s19 = scalar_lea.vmem %s0, 62
    %v20 = vld [vmem:[%s19] sm:$0x1]
    %s21 = scalar_lea.vmem %s0, 125
    %v22 = vld [vmem:[%s21] sm:$0x2]
    %vm23 = vcmask 1041409
    %v24 = vsel %vm23, %v22, %v20
    %25 = vrot.lane.b32.xlu0 %v24, 124
    %v26 = vpop.permute.xlu0 %25
    %vm27 = vcmask 1032160
    %28 = vst.msk [vmem:[#allocation0] sm:$0x3] %vm27, %v26
    %s29 = scalar_lea.vmem %s0, 61
    %v30 = vld [vmem:[%s29] sm:$0x1]
    %s31 = scalar_lea.vmem %s0, 124
    %v32 = vld [vmem:[%s31] sm:$0x2]
    %vm33 = vcmask 1041409
    %v34 = vsel %vm33, %v32, %v30
    %35 = vrot.lane.b32.xlu0 %v34, 122
    %v36 = vpop.permute.xlu0 %35
    %vm37 = vcmask 1015760
    %38 = vst.msk [vmem:[#allocation0] sm:$0x3] %vm37, %v36
    %s39 = scalar_lea.vmem %s0, 60
    %v40 = vld [vmem:[%s39] sm:$0x1]
    %s41 = scalar_lea.vmem %s0, 123
    %v42 = vld [vmem:[%s41] sm:$0x2]
    %vm43 = vcmask 1041409
    %v44 = vsel %vm43, %v42, %v40
    %45 = vrot.lane.b32.xlu0 %v44, 120
    %v46 = vpop.permute.xlu0 %45
    %vm47 = vcmask 999360
    %48 = vst.msk [vmem:[#allocation0] sm:$0x3] %vm47, %v46
    %s49 = scalar_lea.vmem %s0, 59
    %v50 = vld [vmem:[%s49] sm:$0x1]
    %s51 = scalar_lea.vmem %s0, 122
    %v52 = vld [vmem:[%s51] sm:$0x2]
    %vm53 = vcmask 1041409
    %v54 = vsel %vm53, %v52, %v50
    %55 = vrot.lane.b32.xlu0 %v54, 118
    %v56 = vpop.permute.xlu0 %55
    %vm57 = vcmask 982960
    %58 = vst.msk [vmem:[#allocation0] sm:$0x3] %vm57, %v56
    %s59 = scalar_lea.vmem %s0, 58
    %v60 = vld [vmem:[%s59] sm:$0x1]
    %s61 = scalar_lea.vmem %s0, 121
    %v62 = vld [vmem:[%s61] sm:$0x2]
    %vm63 = vcmask 1041409
    %v64 = vsel %vm63, %v62, %v60
    %65 = vrot.lane.b32.xlu0 %v64, 116
    %v66 = vpop.permute.xlu0 %65
    %vm67 = vcmask 966560
    %68 = vst.msk [vmem:[#allocation0] sm:$0x3] %vm67, %v66
    %s69 = scalar_lea.vmem %s0, 57
    %v70 = vld [vmem:[%s69] sm:$0x1]
    %s71 = scalar_lea.vmem %s0, 120
    %v72 = vld [vmem:[%s71] sm:$0x2]
    %vm73 = vcmask 1041409
    %v74 = vsel %vm73, %v72, %v70
    %75 = vrot.lane.b32.xlu0 %v74, 114
    %v76 = vpop.permute.xlu0 %75
    %vm77 = vcmask 950160
    %78 = vst.msk [vmem:[#allocation0] sm:$0x3] %vm77, %v76
    %s79 = scalar_lea.vmem %s0, 56
    %v80 = vld [vmem:[%s79] sm:$0x1]
    %s81 = scalar_lea.vmem %s0, 119
    %v82 = vld [vmem:[%s81] sm:$0x2]
    %vm83 = vcmask 1041409
    %v84 = vsel %vm83, %v82, %v80
    %85 = vrot.lane.b32.xlu0 %v84, 112
    %v86 = vpop.permute.xlu0 %85
    %vm87 = vcmask 933760
    %88 = vst.msk [vmem:[#allocation0] sm:$0x3] %vm87, %v86
    %s89 = scalar_lea.vmem %s0, 55
    %v90 = vld [vmem:[%s89] sm:$0x1]
    %s91 = scalar_lea.vmem %s0, 118
    %v92 = vld [vmem:[%s91] sm:$0x2]
    %vm93 = vcmask 1041409
    %v94 = vsel %vm93, %v92, %v90
    %95 = vrot.lane.b32.xlu0 %v94, 110
    %v96 = vpop.permute.xlu0 %95
    %vm97 = vcmask 917360
    %98 = vst.msk [vmem:[#allocation0] sm:$0x3] %vm97, %v96
    %s99 = scalar_lea.vmem %s0, 54
    %v100 = vld [vmem:[%s99] sm:$0x1]
    %s101 = scalar_lea.vmem %s0, 117
    %v102 = vld [vmem:[%s101] sm:$0x2]
    %vm103 = vcmask 1041409
    %v104 = vsel %vm103, %v102, %v100
    %105 = vrot.lane.b32.xlu0 %v104, 108
    %v106 = vpop.permute.xlu0 %105
    %vm107 = vcmask 900960
    %108 = vst.msk [vmem:[#allocation0] sm:$0x3] %vm107, %v106
    %s109 = scalar_lea.vmem %s0, 53
    %v110 = vld [vmem:[%s109] sm:$0x1]
    %s111 = scalar_lea.vmem %s0, 116
    %v112 = vld [vmem:[%s111] sm:$0x2]
    %vm113 = vcmask 1041409
    %v114 = vsel %vm113, %v112, %v110
    %115 = vrot.lane.b32.xlu0 %v114, 106
    %v116 = vpop.permute.xlu0 %115
    %vm117 = vcmask 884560
    %118 = vst.msk [vmem:[#allocation0] sm:$0x3] %vm117, %v116
    %s119 = scalar_lea.vmem %s0, 52
    %v120 = vld [vmem:[%s119] sm:$0x1]
    %s121 = scalar_lea.vmem %s0, 115
    %v122 = vld [vmem:[%s121] sm:$0x2]
    %vm123 = vcmask 1041409
    %v124 = vsel %vm123, %v122, %v120
    %125 = vrot.lane.b32.xlu0 %v124, 104
    %v126 = vpop.permute.xlu0 %125
    %vm127 = vcmask 868160
    %128 = vst.msk [vmem:[#allocation0] sm:$0x3] %vm127, %v126
    %s129 = scalar_lea.vmem %s0, 51
    %v130 = vld [vmem:[%s129] sm:$0x1]
    %s131 = scalar_lea.vmem %s0, 114
    %v132 = vld [vmem:[%s131] sm:$0x2]
    %vm133 = vcmask 1041409
    %v134 = vsel %vm133, %v132, %v130
    %135 = vrot.lane.b32.xlu0 %v134, 102
    %v136 = vpop.permute.xlu0 %135
    %vm137 = vcmask 851760
    %138 = vst.msk [vmem:[#allocation0] sm:$0x3] %vm137, %v136
    %s139 = scalar_lea.vmem %s0, 50
    %v140 = vld [vmem:[%s139] sm:$0x1]
    %s141 = scalar_lea.vmem %s0, 113
    %v142 = vld [vmem:[%s141] sm:$0x2]
    %vm143 = vcmask 1041409
    %v144 = vsel %vm143, %v142, %v140
    %145 = vrot.lane.b32.xlu0 %v144, 100
    %v146 = vpop.permute.xlu0 %145
    %vm147 = vcmask 835360
    %148 = vst.msk [vmem:[#allocation0] sm:$0x3] %vm147, %v146
    %s149 = scalar_lea.vmem %s0, 49
    %v150 = vld [vmem:[%s149] sm:$0x1]
    %s151 = scalar_lea.vmem %s0, 112
    %v152 = vld [vmem:[%s151] sm:$0x2]
    %vm153 = vcmask 1041409
    %v154 = vsel %vm153, %v152, %v150
    %155 = vrot.lane.b32.xlu0 %v154, 98
    %v156 = vpop.permute.xlu0 %155
    %vm157 = vcmask 818960
    %158 = vst.msk [vmem:[#allocation0] sm:$0x3] %vm157, %v156
    %s159 = scalar_lea.vmem %s0, 48
    %v160 = vld [vmem:[%s159] sm:$0x1]
    %s161 = scalar_lea.vmem %s0, 111
    %v162 = vld [vmem:[%s161] sm:$0x2]
    %vm163 = vcmask 1041409
    %v164 = vsel %vm163, %v162, %v160
    %165 = vrot.lane.b32.xlu0 %v164, 96
    %v166 = vpop.permute.xlu0 %165
    %vm167 = vcmask 802560
    %168 = vst.msk [vmem:[#allocation0] sm:$0x3] %vm167, %v166
    %s169 = scalar_lea.vmem %s0, 47
    %v170 = vld [vmem:[%s169] sm:$0x1]
    %s171 = scalar_lea.vmem %s0, 110
    %v172 = vld [vmem:[%s171] sm:$0x2]
    %vm173 = vcmask 1041409
    %v174 = vsel %vm173, %v172, %v170
    %175 = vrot.lane.b32.xlu0 %v174, 94
    %v176 = vpop.permute.xlu0 %175
    %vm177 = vcmask 786160
    %178 = vst.msk [vmem:[#allocation0] sm:$0x3] %vm177, %v176
    %s179 = scalar_lea.vmem %s0, 46
    %v180 = vld [vmem:[%s179] sm:$0x1]
    %s181 = scalar_lea.vmem %s0, 109
    %v182 = vld [vmem:[%s181] sm:$0x2]
    %vm183 = vcmask 1041409
    %v184 = vsel %vm183, %v182, %v180
    %185 = vrot.lane.b32.xlu0 %v184, 92
    %v186 = vpop.permute.xlu0 %185
    %vm187 = vcmask 769760
    %188 = vst.msk [vmem:[#allocation0] sm:$0x3] %vm187, %v186
    %s189 = scalar_lea.vmem %s0, 45
    %v190 = vld [vmem:[%s189] sm:$0x1]
    %s191 = scalar_lea.vmem %s0, 108
    %v192 = vld [vmem:[%s191] sm:$0x2]
    %vm193 = vcmask 1041409
    %v194 = vsel %vm193, %v192, %v190
    %195 = vrot.lane.b32.xlu0 %v194, 90
    %v196 = vpop.permute.xlu0 %195
    %vm197 = vcmask 753360
    %198 = vst.msk [vmem:[#allocation0] sm:$0x3] %vm197, %v196
    %s199 = scalar_lea.vmem %s0, 44
    %v200 = vld [vmem:[%s199] sm:$0x1]
    %s201 = scalar_lea.vmem %s0, 107
    %v202 = vld [vmem:[%s201] sm:$0x2]
    %vm203 = vcmask 1041409
    %v204 = vsel %vm203, %v202, %v200
    %205 = vrot.lane.b32.xlu0 %v204, 88
    %v206 = vpop.permute.xlu0 %205
    %vm207 = vcmask 736960
    %208 = vst.msk [vmem:[#allocation0] sm:$0x3] %vm207, %v206
    %s209 = scalar_lea.vmem %s0, 43
    %v210 = vld [vmem:[%s209] sm:$0x1]
    %s211 = scalar_lea.vmem %s0, 106
    %v212 = vld [vmem:[%s211] sm:$0x2]
    %vm213 = vcmask 1041409
    %v214 = vsel %vm213, %v212, %v210
    %215 = vrot.lane.b32.xlu0 %v214, 86
    %v216 = vpop.permute.xlu0 %215
    %vm217 = vcmask 720560
    %218 = vst.msk [vmem:[#allocation0] sm:$0x3] %vm217, %v216
    %s219 = scalar_lea.vmem %s0, 42
    %v220 = vld [vmem:[%s219] sm:$0x1]
    %s221 = scalar_lea.vmem %s0, 105
    %v222 = vld [vmem:[%s221] sm:$0x2]
    %vm223 = vcmask 1041409
    %v224 = vsel %vm223, %v222, %v220
    %225 = vrot.lane.b32.xlu0 %v224, 84
    %v226 = vpop.permute.xlu0 %225
    %vm227 = vcmask 704160
    %228 = vst.msk [vmem:[#allocation0] sm:$0x3] %vm227, %v226
    %s229 = scalar_lea.vmem %s0, 41
    %v230 = vld [vmem:[%s229] sm:$0x1]
    %s231 = scalar_lea.vmem %s0, 104
    %v232 = vld [vmem:[%s231] sm:$0x2]
    %vm233 = vcmask 1041409
    %v234 = vsel %vm233, %v232, %v230
    %235 = vrot.lane.b32.xlu0 %v234, 82
    %v236 = vpop.permute.xlu0 %235
    %vm237 = vcmask 687760
    %238 = vst.msk [vmem:[#allocation0] sm:$0x3] %vm237, %v236
    %s239 = scalar_lea.vmem %s0, 40
    %v240 = vld [vmem:[%s239] sm:$0x1]
    %s241 = scalar_lea.vmem %s0, 103
    %v242 = vld [vmem:[%s241] sm:$0x2]
    %vm243 = vcmask 1041409
    %v244 = vsel %vm243, %v242, %v240
    %245 = vrot.lane.b32.xlu0 %v244, 80
    %v246 = vpop.permute.xlu0 %245
    %vm247 = vcmask 671360
    %248 = vst.msk [vmem:[#allocation0] sm:$0x3] %vm247, %v246
    %s249 = scalar_lea.vmem %s0, 39
    %v250 = vld [vmem:[%s249] sm:$0x1]
    %s251 = scalar_lea.vmem %s0, 102
    %v252 = vld [vmem:[%s251] sm:$0x2]
    %vm253 = vcmask 1041409
    %v254 = vsel %vm253, %v252, %v250
    %255 = vrot.lane.b32.xlu0 %v254, 78
    %v256 = vpop.permute.xlu0 %255
    %vm257 = vcmask 654960
    %258 = vst.msk [vmem:[#allocation0] sm:$0x3] %vm257, %v256
    %s259 = scalar_lea.vmem %s0, 38
    %v260 = vld [vmem:[%s259] sm:$0x1]
    %s261 = scalar_lea.vmem %s0, 101
    %v262 = vld [vmem:[%s261] sm:$0x2]
    %vm263 = vcmask 1041409
    %v264 = vsel %vm263, %v262, %v260
    %265 = vrot.lane.b32.xlu0 %v264, 76
    %v266 = vpop.permute.xlu0 %265
    %vm267 = vcmask 638560
    %268 = vst.msk [vmem:[#allocation0] sm:$0x3] %vm267, %v266
    %s269 = scalar_lea.vmem %s0, 37
    %v270 = vld [vmem:[%s269] sm:$0x1]
    %s271 = scalar_lea.vmem %s0, 100
    %v272 = vld [vmem:[%s271] sm:$0x2]
    %vm273 = vcmask 1041409
    %v274 = vsel %vm273, %v272, %v270
    %275 = vrot.lane.b32.xlu0 %v274, 74
    %v276 = vpop.permute.xlu0 %275
    %vm277 = vcmask 622160
    %278 = vst.msk [vmem:[#allocation0] sm:$0x3] %vm277, %v276
    %s279 = scalar_lea.vmem %s0, 36
    %v280 = vld [vmem:[%s279] sm:$0x1]
    %s281 = scalar_lea.vmem %s0, 99
    %v282 = vld [vmem:[%s281] sm:$0x2]
    %vm283 = vcmask 1041409
    %v284 = vsel %vm283, %v282, %v280
    %285 = vrot.lane.b32.xlu0 %v284, 72
    %v286 = vpop.permute.xlu0 %285
    %vm287 = vcmask 605760
    %288 = vst.msk [vmem:[#allocation0] sm:$0x3] %vm287, %v286
    %s289 = scalar_lea.vmem %s0, 35
    %v290 = vld [vmem:[%s289] sm:$0x1]
    %s291 = scalar_lea.vmem %s0, 98
    %v292 = vld [vmem:[%s291] sm:$0x2]
    %vm293 = vcmask 1041409
    %v294 = vsel %vm293, %v292, %v290
    %295 = vrot.lane.b32.xlu0 %v294, 70
    %v296 = vpop.permute.xlu0 %295
    %vm297 = vcmask 589360
    %298 = vst.msk [vmem:[#allocation0] sm:$0x3] %vm297, %v296
    %s299 = scalar_lea.vmem %s0, 34
    %v300 = vld [vmem:[%s299] sm:$0x1]
    %s301 = scalar_lea.vmem %s0, 97
    %v302 = vld [vmem:[%s301] sm:$0x2]
    %vm303 = vcmask 1041409
    %v304 = vsel %vm303, %v302, %v300
    %305 = vrot.lane.b32.xlu0 %v304, 68
    %v306 = vpop.permute.xlu0 %305
    %vm307 = vcmask 572960
    %308 = vst.msk [vmem:[#allocation0] sm:$0x3] %vm307, %v306
    %s309 = scalar_lea.vmem %s0, 33
    %v310 = vld [vmem:[%s309] sm:$0x1]
    %s311 = scalar_lea.vmem %s0, 96
    %v312 = vld [vmem:[%s311] sm:$0x2]
    %vm313 = vcmask 1041409
    %v314 = vsel %vm313, %v312, %v310
    %315 = vrot.lane.b32.xlu0 %v314, 66
    %v316 = vpop.permute.xlu0 %315
    %vm317 = vcmask 556560
    %318 = vst.msk [vmem:[#allocation0] sm:$0x3] %vm317, %v316
    %s319 = scalar_lea.vmem %s0, 32
    %v320 = vld [vmem:[%s319] sm:$0x1]
    %s321 = scalar_lea.vmem %s0, 95
    %v322 = vld [vmem:[%s321] sm:$0x2]
    %vm323 = vcmask 1041409
    %v324 = vsel %vm323, %v322, %v320
    %325 = vrot.lane.b32.xlu0 %v324, 64
    %v326 = vpop.permute.xlu0 %325
    %vm327 = vcmask 540160
    %328 = vst.msk [vmem:[#allocation0] sm:$0x3] %vm327, %v326
    %s329 = scalar_lea.vmem %s0, 31
    %v330 = vld [vmem:[%s329] sm:$0x1]
    %s331 = scalar_lea.vmem %s0, 94
    %v332 = vld [vmem:[%s331] sm:$0x2]
    %vm333 = vcmask 1041409
    %v334 = vsel %vm333, %v332, %v330
    %335 = vrot.lane.b32.xlu0 %v334, 62
    %v336 = vpop.permute.xlu0 %335
    %vm337 = vcmask 523760
    %338 = vst.msk [vmem:[#allocation0] sm:$0x3] %vm337, %v336
    %s339 = scalar_lea.vmem %s0, 30
    %v340 = vld [vmem:[%s339] sm:$0x1]
    %s341 = scalar_lea.vmem %s0, 93
    %v342 = vld [vmem:[%s341] sm:$0x2]
    %vm343 = vcmask 1041409
    %v344 = vsel %vm343, %v342, %v340
    %345 = vrot.lane.b32.xlu0 %v344, 60
    %v346 = vpop.permute.xlu0 %345
    %vm347 = vcmask 507360
    %348 = vst.msk [vmem:[#allocation0] sm:$0x3] %vm347, %v346
    %s349 = scalar_lea.vmem %s0, 29
    %v350 = vld [vmem:[%s349] sm:$0x1]
    %s351 = scalar_lea.vmem %s0, 92
    %v352 = vld [vmem:[%s351] sm:$0x2]
    %vm353 = vcmask 1041409
    %v354 = vsel %vm353, %v352, %v350
    %355 = vrot.lane.b32.xlu0 %v354, 58
    %v356 = vpop.permute.xlu0 %355
    %vm357 = vcmask 490960
    %358 = vst.msk [vmem:[#allocation0] sm:$0x3] %vm357, %v356
    %s359 = scalar_lea.vmem %s0, 28
    %v360 = vld [vmem:[%s359] sm:$0x1]
    %s361 = scalar_lea.vmem %s0, 91
    %v362 = vld [vmem:[%s361] sm:$0x2]
    %vm363 = vcmask 1041409
    %v364 = vsel %vm363, %v362, %v360
    %365 = vrot.lane.b32.xlu0 %v364, 56
    %v366 = vpop.permute.xlu0 %365
    %vm367 = vcmask 474560
    %368 = vst.msk [vmem:[#allocation0] sm:$0x3] %vm367, %v366
    %s369 = scalar_lea.vmem %s0, 27
    %v370 = vld [vmem:[%s369] sm:$0x1]
    %s371 = scalar_lea.vmem %s0, 90
    %v372 = vld [vmem:[%s371] sm:$0x2]
    %vm373 = vcmask 1041409
    %v374 = vsel %vm373, %v372, %v370
    %375 = vrot.lane.b32.xlu0 %v374, 54
    %v376 = vpop.permute.xlu0 %375
    %vm377 = vcmask 458160
    %378 = vst.msk [vmem:[#allocation0] sm:$0x3] %vm377, %v376
    %s379 = scalar_lea.vmem %s0, 26
    %v380 = vld [vmem:[%s379] sm:$0x1]
    %s381 = scalar_lea.vmem %s0, 89
    %v382 = vld [vmem:[%s381] sm:$0x2]
    %vm383 = vcmask 1041409
    %v384 = vsel %vm383, %v382, %v380
    %385 = vrot.lane.b32.xlu0 %v384, 52
    %v386 = vpop.permute.xlu0 %385
    %vm387 = vcmask 441760
    %388 = vst.msk [vmem:[#allocation0] sm:$0x3] %vm387, %v386
    %s389 = scalar_lea.vmem %s0, 25
    %v390 = vld [vmem:[%s389] sm:$0x1]
    %s391 = scalar_lea.vmem %s0, 88
    %v392 = vld [vmem:[%s391] sm:$0x2]
    %vm393 = vcmask 1041409
    %v394 = vsel %vm393, %v392, %v390
    %395 = vrot.lane.b32.xlu0 %v394, 50
    %v396 = vpop.permute.xlu0 %395
    %vm397 = vcmask 425360
    %398 = vst.msk [vmem:[#allocation0] sm:$0x3] %vm397, %v396
    %s399 = scalar_lea.vmem %s0, 24
    %v400 = vld [vmem:[%s399] sm:$0x1]
    %s401 = scalar_lea.vmem %s0, 87
    %v402 = vld [vmem:[%s401] sm:$0x2]
    %vm403 = vcmask 1041409
    %v404 = vsel %vm403, %v402, %v400
    %405 = vrot.lane.b32.xlu0 %v404, 48
    %v406 = vpop.permute.xlu0 %405
    %vm407 = vcmask 408960
    %408 = vst.msk [vmem:[#allocation0] sm:$0x3] %vm407, %v406
    %s409 = scalar_lea.vmem %s0, 23
    %v410 = vld [vmem:[%s409] sm:$0x1]
    %s411 = scalar_lea.vmem %s0, 86
    %v412 = vld [vmem:[%s411] sm:$0x2]
    %vm413 = vcmask 1041409
    %v414 = vsel %vm413, %v412, %v410
    %415 = vrot.lane.b32.xlu0 %v414, 46
    %v416 = vpop.permute.xlu0 %415
    %vm417 = vcmask 392560
    %418 = vst.msk [vmem:[#allocation0] sm:$0x3] %vm417, %v416
    %s419 = scalar_lea.vmem %s0, 22
    %v420 = vld [vmem:[%s419] sm:$0x1]
    %s421 = scalar_lea.vmem %s0, 85
    %v422 = vld [vmem:[%s421] sm:$0x2]
    %vm423 = vcmask 1041409
    %v424 = vsel %vm423, %v422, %v420
    %425 = vrot.lane.b32.xlu0 %v424, 44
    %v426 = vpop.permute.xlu0 %425
    %vm427 = vcmask 376160
    %428 = vst.msk [vmem:[#allocation0] sm:$0x3] %vm427, %v426
    %s429 = scalar_lea.vmem %s0, 21
    %v430 = vld [vmem:[%s429] sm:$0x1]
    %s431 = scalar_lea.vmem %s0, 84
    %v432 = vld [vmem:[%s431] sm:$0x2]
    %vm433 = vcmask 1041409
    %v434 = vsel %vm433, %v432, %v430
    %435 = vrot.lane.b32.xlu0 %v434, 42
    %v436 = vpop.permute.xlu0 %435
    %vm437 = vcmask 359760
    %438 = vst.msk [vmem:[#allocation0] sm:$0x3] %vm437, %v436
    %s439 = scalar_lea.vmem %s0, 20
    %v440 = vld [vmem:[%s439] sm:$0x1]
    %s441 = scalar_lea.vmem %s0, 83
    %v442 = vld [vmem:[%s441] sm:$0x2]
    %vm443 = vcmask 1041409
    %v444 = vsel %vm443, %v442, %v440
    %445 = vrot.lane.b32.xlu0 %v444, 40
    %v446 = vpop.permute.xlu0 %445
    %vm447 = vcmask 343360
    %448 = vst.msk [vmem:[#allocation0] sm:$0x3] %vm447, %v446
    %s449 = scalar_lea.vmem %s0, 19
    %v450 = vld [vmem:[%s449] sm:$0x1]
    %s451 = scalar_lea.vmem %s0, 82
    %v452 = vld [vmem:[%s451] sm:$0x2]
    %vm453 = vcmask 1041409
    %v454 = vsel %vm453, %v452, %v450
    %455 = vrot.lane.b32.xlu0 %v454, 38
    %v456 = vpop.permute.xlu0 %455
    %vm457 = vcmask 326960
    %458 = vst.msk [vmem:[#allocation0] sm:$0x3] %vm457, %v456
    %s459 = scalar_lea.vmem %s0, 18
    %v460 = vld [vmem:[%s459] sm:$0x1]
    %s461 = scalar_lea.vmem %s0, 81
    %v462 = vld [vmem:[%s461] sm:$0x2]
    %vm463 = vcmask 1041409
    %v464 = vsel %vm463, %v462, %v460
    %465 = vrot.lane.b32.xlu0 %v464, 36
    %v466 = vpop.permute.xlu0 %465
    %vm467 = vcmask 310560
    %468 = vst.msk [vmem:[#allocation0] sm:$0x3] %vm467, %v466
    %s469 = scalar_lea.vmem %s0, 17
    %v470 = vld [vmem:[%s469] sm:$0x1]
    %s471 = scalar_lea.vmem %s0, 80
    %v472 = vld [vmem:[%s471] sm:$0x2]
    %vm473 = vcmask 1041409
    %v474 = vsel %vm473, %v472, %v470
    %475 = vrot.lane.b32.xlu0 %v474, 34
    %v476 = vpop.permute.xlu0 %475
    %vm477 = vcmask 294160
    %478 = vst.msk [vmem:[#allocation0] sm:$0x3] %vm477, %v476
    %s479 = scalar_lea.vmem %s0, 16
    %v480 = vld [vmem:[%s479] sm:$0x1]
    %s481 = scalar_lea.vmem %s0, 79
    %v482 = vld [vmem:[%s481] sm:$0x2]
    %vm483 = vcmask 1041409
    %v484 = vsel %vm483, %v482, %v480
    %485 = vrot.lane.b32.xlu0 %v484, 32
    %v486 = vpop.permute.xlu0 %485
    %vm487 = vcmask 277760
    %488 = vst.msk [vmem:[#allocation0] sm:$0x3] %vm487, %v486
    %s489 = scalar_lea.vmem %s0, 15
    %v490 = vld [vmem:[%s489] sm:$0x1]
    %s491 = scalar_lea.vmem %s0, 78
    %v492 = vld [vmem:[%s491] sm:$0x2]
    %vm493 = vcmask 1041409
    %v494 = vsel %vm493, %v492, %v490
    %495 = vrot.lane.b32.xlu0 %v494, 30
    %v496 = vpop.permute.xlu0 %495
    %vm497 = vcmask 261360
    %498 = vst.msk [vmem:[#allocation0] sm:$0x3] %vm497, %v496
    %s499 = scalar_lea.vmem %s0, 14
    %v500 = vld [vmem:[%s499] sm:$0x1]
    %s501 = scalar_lea.vmem %s0, 77
    %v502 = vld [vmem:[%s501] sm:$0x2]
    %vm503 = vcmask 1041409
    %v504 = vsel %vm503, %v502, %v500
    %505 = vrot.lane.b32.xlu0 %v504, 28
    %v506 = vpop.permute.xlu0 %505
    %vm507 = vcmask 244960
    %508 = vst.msk [vmem:[#allocation0] sm:$0x3] %vm507, %v506
    %s509 = scalar_lea.vmem %s0, 13
    %v510 = vld [vmem:[%s509] sm:$0x1]
    %s511 = scalar_lea.vmem %s0, 76
    %v512 = vld [vmem:[%s511] sm:$0x2]
    %vm513 = vcmask 1041409
    %v514 = vsel %vm513, %v512, %v510
    %515 = vrot.lane.b32.xlu0 %v514, 26
    %v516 = vpop.permute.xlu0 %515
    %vm517 = vcmask 228560
    %518 = vst.msk [vmem:[#allocation0] sm:$0x3] %vm517, %v516
    %s519 = scalar_lea.vmem %s0, 12
    %v520 = vld [vmem:[%s519] sm:$0x1]
    %s521 = scalar_lea.vmem %s0, 75
    %v522 = vld [vmem:[%s521] sm:$0x2]
    %vm523 = vcmask 1041409
    %v524 = vsel %vm523, %v522, %v520
    %525 = vrot.lane.b32.xlu0 %v524, 24
    %v526 = vpop.permute.xlu0 %525
    %vm527 = vcmask 212160
    %528 = vst.msk [vmem:[#allocation0] sm:$0x3] %vm527, %v526
    %s529 = scalar_lea.vmem %s0, 11
    %v530 = vld [vmem:[%s529] sm:$0x1]
    %s531 = scalar_lea.vmem %s0, 74
    %v532 = vld [vmem:[%s531] sm:$0x2]
    %vm533 = vcmask 1041409
    %v534 = vsel %vm533, %v532, %v530
    %535 = vrot.lane.b32.xlu0 %v534, 22
    %v536 = vpop.permute.xlu0 %535
    %vm537 = vcmask 195760
    %538 = vst.msk [vmem:[#allocation0] sm:$0x3] %vm537, %v536
    %s539 = scalar_lea.vmem %s0, 10
    %v540 = vld [vmem:[%s539] sm:$0x1]
    %s541 = scalar_lea.vmem %s0, 73
    %v542 = vld [vmem:[%s541] sm:$0x2]
    %vm543 = vcmask 1041409
    %v544 = vsel %vm543, %v542, %v540
    %545 = vrot.lane.b32.xlu0 %v544, 20
    %v546 = vpop.permute.xlu0 %545
    %vm547 = vcmask 179360
    %548 = vst.msk [vmem:[#allocation0] sm:$0x3] %vm547, %v546
    %s549 = scalar_lea.vmem %s0, 9
    %v550 = vld [vmem:[%s549] sm:$0x1]
    %s551 = scalar_lea.vmem %s0, 72
    %v552 = vld [vmem:[%s551] sm:$0x2]
    %vm553 = vcmask 1041409
    %v554 = vsel %vm553, %v552, %v550
    %555 = vrot.lane.b32.xlu0 %v554, 18
    %v556 = vpop.permute.xlu0 %555
    %vm557 = vcmask 162960
    %558 = vst.msk [vmem:[#allocation0] sm:$0x3] %vm557, %v556
    %s559 = scalar_lea.vmem %s0, 8
    %v560 = vld [vmem:[%s559] sm:$0x1]
    %s561 = scalar_lea.vmem %s0, 71
    %v562 = vld [vmem:[%s561] sm:$0x2]
    %vm563 = vcmask 1041409
    %v564 = vsel %vm563, %v562, %v560
    %565 = vrot.lane.b32.xlu0 %v564, 16
    %v566 = vpop.permute.xlu0 %565
    %vm567 = vcmask 146560
    %568 = vst.msk [vmem:[#allocation0] sm:$0x3] %vm567, %v566
    %s569 = scalar_lea.vmem %s0, 7
    %v570 = vld [vmem:[%s569] sm:$0x1]
    %s571 = scalar_lea.vmem %s0, 70
    %v572 = vld [vmem:[%s571] sm:$0x2]
    %vm573 = vcmask 1041409
    %v574 = vsel %vm573, %v572, %v570
    %575 = vrot.lane.b32.xlu0 %v574, 14
    %v576 = vpop.permute.xlu0 %575
    %vm577 = vcmask 130160
    %578 = vst.msk [vmem:[#allocation0] sm:$0x3] %vm577, %v576
    %s579 = scalar_lea.vmem %s0, 6
    %v580 = vld [vmem:[%s579] sm:$0x1]
    %s581 = scalar_lea.vmem %s0, 69
    %v582 = vld [vmem:[%s581] sm:$0x2]
    %vm583 = vcmask 1041409
    %v584 = vsel %vm583, %v582, %v580
    %585 = vrot.lane.b32.xlu0 %v584, 12
    %v586 = vpop.permute.xlu0 %585
    %vm587 = vcmask 113760
    %588 = vst.msk [vmem:[#allocation0] sm:$0x3] %vm587, %v586
    %s589 = scalar_lea.vmem %s0, 5
    %v590 = vld [vmem:[%s589] sm:$0x1]
    %s591 = scalar_lea.vmem %s0, 68
    %v592 = vld [vmem:[%s591] sm:$0x2]
    %vm593 = vcmask 1041409
    %v594 = vsel %vm593, %v592, %v590
    %595 = vrot.lane.b32.xlu0 %v594, 10
    %v596 = vpop.permute.xlu0 %595
    %vm597 = vcmask 97360
    %598 = vst.msk [vmem:[#allocation0] sm:$0x3] %vm597, %v596
    %s599 = scalar_lea.vmem %s0, 4
    %v600 = vld [vmem:[%s599] sm:$0x1]
    %s601 = scalar_lea.vmem %s0, 67
    %v602 = vld [vmem:[%s601] sm:$0x2]
    %vm603 = vcmask 1041409
    %v604 = vsel %vm603, %v602, %v600
    %605 = vrot.lane.b32.xlu0 %v604, 8
    %v606 = vpop.permute.xlu0 %605
    %vm607 = vcmask 80960
    %608 = vst.msk [vmem:[#allocation0] sm:$0x3] %vm607, %v606
    %s609 = scalar_lea.vmem %s0, 3
    %v610 = vld [vmem:[%s609] sm:$0x1]
    %s611 = scalar_lea.vmem %s0, 66
    %v612 = vld [vmem:[%s611] sm:$0x2]
    %vm613 = vcmask 1041409
    %v614 = vsel %vm613, %v612, %v610
    %615 = vrot.lane.b32.xlu0 %v614, 6
    %v616 = vpop.permute.xlu0 %615
    %vm617 = vcmask 64560
    %618 = vst.msk [vmem:[#allocation0] sm:$0x3] %vm617, %v616
    %s619 = scalar_lea.vmem %s0, 2
    %v620 = vld [vmem:[%s619] sm:$0x1]
    %s621 = scalar_lea.vmem %s0, 65
    %v622 = vld [vmem:[%s621] sm:$0x2]
    %vm623 = vcmask 1041409
    %v624 = vsel %vm623, %v622, %v620
    %625 = vrot.lane.b32.xlu0 %v624, 4
    %v626 = vpop.permute.xlu0 %625
    %vm627 = vcmask 48160
    %628 = vst.msk [vmem:[#allocation0] sm:$0x3] %vm627, %v626
    %s629 = scalar_lea.vmem %s0, 1
    %v630 = vld [vmem:[%s629] sm:$0x1]
    %s631 = scalar_lea.vmem %s0, 64
    %v632 = vld [vmem:[%s631] sm:$0x2]
    %vm633 = vcmask 1041409
    %v634 = vsel %vm633, %v632, %v630
    %635 = vrot.lane.b32.xlu0 %v634, 2
    %v636 = vpop.permute.xlu0 %635
    %vm637 = vcmask 31760
    %638 = vst.msk [vmem:[#allocation0] sm:$0x3] %vm637, %v636
    %s640 = sshll.u32 1, 2
    %s641 = ssub.s32 %s640, 1
    %v643 = vld [vmem:[#allocation0] sm:%s641]
    %s644 = sshll.u32 1, 2
    %s645 = ssub.s32 %s644, 1
    %646 = vst [vmem:[%s1] sm:%s645] %v643

// kernel: model_forward.1
$region0: #{model_forward.1}
  #allocation0 [shape = 'u32[]', space=smem, size = 0x4, offset = 0x4, fixed_abs, tag = 'smem constant byte address 0x4 - core index']
  #allocation1 [shape = 'u32[144,128]{1,0:T(1,128)}', space=vmem, size = 0x12000, scoped, tag = 'internal scratch']
  %s0 = inlined_call_operand.vmem [shape: f32[2,2], index: 0, kind: input, shape index: {}]
  %s1 = inlined_call_operand.vmem [shape: f32[2], index: 1, kind: input, shape index: {}]
  %s2 = inlined_call_operand.vmem [shape: f32[2,2], index: 2, kind: input, shape index: {}]
  %s3 = inlined_call_operand.vmem [shape: f32[2,128], index: 3, kind: input, shape index: {}]
  %s4 = inlined_call_operand.vmem [shape: f32[2,128], index: 4, kind: input, shape index: {}]
  %s5 = inlined_call_operand.vmem [shape: f32[2,128], index: 5, kind: output, shape index: {}]
  %s6 = sld [smem:[#allocation0]]
  $region42: #{model_forward.1} parent=0
    _
  %s8 = ssub.s32 1, %s6
  %s9 = scalar_select 0, %s8, %s6
  $region1: #{model_forward.1} parent=0
    #allocation2 [shape = 'u8[1024]{0}', space=smem, size = 0x400, scoped, tag = 'input window, operand 0, single buffered']
    #allocation3 [shape = 's32[1]{0}', space=sflag, size = 0x4, scoped, tag = 'scoped memory for model_forward.1']
    #allocation4 [shape = 'u8[512]{0}', space=smem, size = 0x200, scoped, tag = 'input window, operand 1, single buffered']
    #allocation5 [shape = 's32[1]{0}', space=sflag, size = 0x4, scoped, tag = 'scoped memory for model_forward.1']
    #allocation6 [shape = 'u8[1024]{0}', space=smem, size = 0x400, scoped, tag = 'input window, operand 2, single buffered']
    %10 = vsyncpa [#allocation3], 0
    %11 = vsyncpa [#allocation5], 0
    // Predicated region
    $region2: #{model_forward.1} parent=1 // pred_check
      _
    $region3: #{model_forward.1} parent=1 // pred_check_branch
      %13 = sbr.rel (0) target = $region5
    $region4: #{model_forward.1} parent=1 // pred_region
      %s15 = ssub.s32 32, 32
      %16 = vsyncadd [#allocation3], %s15
      %s18 = sshll.u32 %s0, 4
      %s19 = int_to_ptr.vmem [resolvable:$true] %s18
      %21 = dma.vmem_to_smem %s19, 32, [#allocation2], [#allocation3]
    $region5: #{model_forward.1} parent=1 // pred_fallthru
      _
    // Predicated region
    $region6: #{model_forward.1} parent=1 // pred_check
      _
    $region7: #{model_forward.1} parent=1 // pred_check_branch
      %23 = sbr.rel (0) target = $region9
    $region8: #{model_forward.1} parent=1 // pred_region
      %s25 = ssub.s32 16, 16
      %26 = vsyncadd [#allocation5], %s25
      %s28 = sshll.u32 %s1, 4
      %s29 = int_to_ptr.vmem [resolvable:$true] %s28
      %31 = dma.vmem_to_smem %s29, 16, [#allocation4], [#allocation5]
    $region9: #{model_forward.1} parent=1 // pred_fallthru
      _
    // Predicated region
    $region10: #{model_forward.1} parent=1 // pred_check
      _
    $region11: #{model_forward.1} parent=1 // pred_check_branch
      %33 = sbr.rel (0) target = $region13
    $region12: #{model_forward.1} parent=1 // pred_region
      %s35 = ssub.s32 32, 32
      %36 = vsyncadd [#allocation5], %s35
      %s38 = sshll.u32 %s2, 4
      %s39 = int_to_ptr.vmem [resolvable:$true] %s38
      %41 = dma.vmem_to_smem %s39, 32, [#allocation6], [#allocation5]
    $region13: #{model_forward.1} parent=1 // pred_fallthru
      _
    // Predicated region
    $region14: #{model_forward.1} parent=1 // pred_check
      _
    $region15: #{model_forward.1} parent=1 // pred_check_branch
      %43 = sbr.rel (0) target = $region17
    $region16: #{model_forward.1} parent=1 // pred_region
      _
    $region17: #{model_forward.1} parent=1 // pred_fallthru
      _
    // Predicated region
    $region18: #{model_forward.1} parent=1 // pred_check
      _
    $region19: #{model_forward.1} parent=1 // pred_check_branch
      %45 = sbr.rel (0) target = $region21
    $region20: #{model_forward.1} parent=1 // pred_region
      _
    $region21: #{model_forward.1} parent=1 // pred_fallthru
      _
    // Predicated region
    $region22: #{model_forward.1} parent=1 // pred_check
      _
    $region23: #{model_forward.1} parent=1 // pred_check_branch
      %47 = sbr.rel (0) target = $region25
    $region24: #{model_forward.1} parent=1 // pred_region
      %48 = dma.done [#allocation3], 32
    $region25: #{model_forward.1} parent=1 // pred_fallthru
      _
    // Predicated region
    $region26: #{model_forward.1} parent=1 // pred_check
      _
    $region27: #{model_forward.1} parent=1 // pred_check_branch
      %50 = sbr.rel (0) target = $region29
    $region28: #{model_forward.1} parent=1 // pred_region
      %51 = dma.done [#allocation5], 16
    $region29: #{model_forward.1} parent=1 // pred_fallthru
      _
    // Predicated region
    $region30: #{model_forward.1} parent=1 // pred_check
      _
    $region31: #{model_forward.1} parent=1 // pred_check_branch
      %53 = sbr.rel (0) target = $region33
    $region32: #{model_forward.1} parent=1 // pred_region
      %54 = dma.done [#allocation5], 32
    $region33: #{model_forward.1} parent=1 // pred_fallthru
      _
    %55 = sfence
    %v56 = vld [vmem:[%s3] sm:$0x3]
    %s57 = sld [smem:[#allocation2]]
    %v58 = vstv %s57
    %v59 = vmul.f32 %v56, %v58
    %s60 = sld [smem:[#allocation2 + $0x1]]
    %v61 = vstv %s60
    %v62 = vmul.f32 %v56, %v61
    %v64 = vrot.slane %v62, 1
    %v66 = vadd.f32 %v59, %v64
    %s67 = sld [smem:[#allocation4]]
    %v68 = vstv %s67
    %v69 = vadd.f32 %v66, %v68
    %v70 = vmax.f32 %v69, 0.0
    %s71 = sld [smem:[#allocation2 + $0x80]]
    %v72 = vstv %s71
    %v73 = vmul.f32 %v56, %v72
    %s74 = sld [smem:[#allocation2 + $0x81]]
    %v75 = vstv %s74
    %v76 = vmul.f32 %v56, %v75
    %v78 = vrot.slane %v76, 1
    %v80 = vadd.f32 %v73, %v78
    %s81 = sld [smem:[#allocation4 + $0x1]]
    %v82 = vstv %s81
    %v83 = vadd.f32 %v80, %v82
    %v84 = vmax.f32 %v83, 0.0
    %s85 = sld [smem:[#allocation6]]
    %v86 = vstv %s85
    %v87 = vmul.f32 %v70, %v86
    %s88 = sld [smem:[#allocation6 + $0x1]]
    %v89 = vstv %s88
    %v90 = vmul.f32 %v84, %v89
    %v91 = vadd.f32 %v87, %v90
    %v92 = vld [vmem:[%s4] sm:$0x1]
    %v93 = vadd.f32 %v91, %v92
    %94 = vst [vmem:[%s5] sm:$0x1] %v93
    %s95 = sld [smem:[#allocation6 + $0x80]]
    %v96 = vstv %s95
    %v97 = vmul.f32 %v70, %v96
    %s98 = sld [smem:[#allocation6 + $0x81]]
    %v99 = vstv %s98
    %v100 = vmul.f32 %v84, %v99
    %v101 = vadd.f32 %v97, %v100
    %v102 = vld [vmem:[%s4 + $0x1] sm:$0x1]
    %v103 = vadd.f32 %v101, %v102
    %104 = vst [vmem:[%s5 + $0x1] sm:$0x1] %v103
    // Predicated region
    $region34: #{model_forward.1} parent=1 // pred_check
      _
    $region35: #{model_forward.1} parent=1 // pred_check_branch
      %106 = sbr.rel (0) target = $region37
    $region36: #{model_forward.1} parent=1 // pred_region
      _
    $region37: #{model_forward.1} parent=1 // pred_fallthru
      _
    // Predicated region
    $region38: #{model_forward.1} parent=1 // pred_check
      _
    $region39: #{model_forward.1} parent=1 // pred_check_branch
      %108 = sbr.rel (0) target = $region41
    $region40: #{model_forward.1} parent=1 // pred_region
      _
    $region41: #{model_forward.1} parent=1 // pred_fallthru
      _
    %109 = vsyncpa [#allocation3], 1
    %110 = vsyncpa [#allocation5], 1

</llo_original>
